<compile_context>
chip_gen: v6e
topology: v6e:2x2x1
jax: 0.10.0
libtpu: 0.0.40
codegen_flags: <defaults>
</compile_context>

<pallas_src>
import functools
import math

import jax
import jax.numpy as jnp
from jax.experimental import pallas as pl
from jax.experimental.pallas import tpu as pltpu


def _rel_pos_bias_kernel(wT_ref, o_ref, *, num_queries, num_keys,
                         num_buckets, max_distance, tm, n_pad, shift):
    # wT_ref: (H, B) float32 (embedding table, transposed)
    # o_ref : (H, tm * n_pad) float32 -- flattened padded (tm, n_pad) position block
    H, B = wT_ref.shape
    pblk = tm * n_pad
    nb2 = num_buckets // 2
    max_exact = nb2 // 2  # >= 1 (enforced in wrapper)

    # Flat lane index within this row-block of the padded (M_pad, N_pad) grid.
    l = jax.lax.broadcasted_iota(jnp.int32, (1, pblk), 1)
    i = pl.program_id(0) * tm + (l >> shift)   # query row (padded rows harmless)
    j = l & (n_pad - 1)                        # key column (padded cols harmless)

    # rel_pos[i, j] = k_pos[j] - q_pos[i] = j - (num_keys - num_queries + i)
    rel = j - i - (num_keys - num_queries)

    # T5 relative-position bucket (mirrors the PyTorch reference exactly).
    ret = (rel >= 0).astype(jnp.int32) * nb2
    n_abs = jnp.abs(rel)
    is_small = n_abs < max_exact
    # Clamp before the log so the "large" branch stays finite; clamped entries
    # are exactly those discarded by the select below.
    n_f = jnp.maximum(n_abs, max_exact).astype(jnp.float32)
    val_large = max_exact + (
        jnp.log(n_f / max_exact)
        / math.log(max_distance / max_exact)
        * (nb2 - max_exact)
    ).astype(jnp.int32)
    val_large = jnp.minimum(val_large, nb2 - 1)
    bucket = ret + jnp.where(is_small, n_abs, val_large)   # (1, pblk) int32

    # Embedding lookup as one-hot x W^T on the MXU.
    b_iota = jax.lax.broadcasted_iota(jnp.int32, (B, pblk), 0)
    onehot = (bucket == b_iota).astype(jnp.float32)         # (B, pblk)
    o_ref[...] = jnp.dot(wT_ref[...], onehot,
                         preferred_element_type=jnp.float32)


@functools.partial(
    jax.jit,
    static_argnames=("num_queries", "num_keys", "num_buckets", "max_distance"),
)
def relative_position_bias(weight, *, num_queries, num_keys,
                           num_buckets, max_distance):
    """weight: (num_buckets, num_heads) f32 embedding table.
    Returns bias of shape (1, num_heads, num_queries, num_keys), float32."""
    assert num_buckets >= 4 and num_buckets % 2 == 0, "need num_buckets even and >= 4"
    B, H = weight.shape
    assert B == num_buckets
    M, N = num_queries, num_keys

    TM = 8                                                   # query rows per grid step
    n_pad = 128 * pl.next_power_of_2(pl.cdiv(N, 128))        # power of two, >= 128
    shift = n_pad.bit_length() - 1
    m_blocks = pl.cdiv(M, TM)
    m_pad = m_blocks * TM
    pblk = TM * n_pad

    wT = weight.astype(jnp.float32).T                        # (H, B), tiny transpose under jit

    kernel = functools.partial(
        _rel_pos_bias_kernel,
        num_queries=M, num_keys=N,
        num_buckets=num_buckets, max_distance=max_distance,
        tm=TM, n_pad=n_pad, shift=shift,
    )

    out_flat = pl.pallas_call(
        kernel,
        out_shape=jax.ShapeDtypeStruct((H, m_pad * n_pad), jnp.float32),
        grid=(m_blocks,),
        in_specs=[pl.BlockSpec((H, B), lambda m: (0, 0))],
        out_specs=pl.BlockSpec((H, pblk), lambda m: (0, m)),
        compiler_params=pltpu.CompilerParams(dimension_semantics=("parallel",)),
    )(wT)

    # Layout plumbing under the same jit: un-flatten the padded grid, drop pads,
    # add the leading batch dim -> (1, H, M, N).
    bias = out_flat.reshape(H, m_pad, n_pad)[:, :M, :N]
    return bias[None]


def _reference(weight, num_queries, num_keys, num_buckets, max_distance):
    """Pure-JAX mirror of the PyTorch RelativePositionBias.forward."""
    i, j = num_queries, num_keys
    q_pos = jnp.arange(j - i, j, dtype=jnp.int32)
    k_pos = jnp.arange(j, dtype=jnp.int32)
    rel_pos = k_pos[None, :] - q_pos[:, None]
    nb = num_buckets // 2
    ret = (rel_pos >= 0).astype(jnp.int32) * nb
    n = jnp.abs(rel_pos)
    max_exact = nb // 2
    is_small = n < max_exact
    val_if_large = max_exact + (
        jnp.log(jnp.maximum(n, max_exact).astype(jnp.float32) / max_exact)
        / math.log(max_distance / max_exact)
        * (nb - max_exact)
    ).astype(jnp.int32)
    val_if_large = jnp.minimum(val_if_large, nb - 1)
    bucket = ret + jnp.where(is_small, n, val_if_large)
    bias = weight[bucket]                         # (M, N, H)
    return jnp.transpose(bias, (2, 0, 1))[None]   # (1, H, M, N)


if __name__ == "__main__":
    key = jax.random.PRNGKey(0)

    num_buckets, max_distance, num_heads = 32, 128, 4
    num_queries, num_keys = 8, 8

    # nn.Embedding(num_buckets, num_heads).weight equivalent
    weight = jax.random.normal(key, (num_buckets, num_heads), dtype=jnp.float32)

    bias = relative_position_bias(
        weight,
        num_queries=num_queries, num_keys=num_keys,
        num_buckets=num_buckets, max_distance=max_distance,
    )
    bias = jax.block_until_ready(bias)

    ref = _reference(weight, num_queries, num_keys, num_buckets, max_distance)

    assert bias.shape == (1, num_heads, num_queries, num_keys), bias.shape
    assert bias.dtype == jnp.float32
    assert jnp.allclose(bias, ref, rtol=1e-5, atol=1e-6), (bias, ref)

    print("KERNEL_OK")
</pallas_src>

<mosaic_0001>
module attributes {stable_mosaic.version = 11 : i64} {
  func.func @_rel_pos_bias_kernel(%arg0: i32, %arg1: memref<4x32xf32, #tpu.memory_space<vmem>>, %arg2: memref<4x1024xf32, #tpu.memory_space<vmem>>) attributes {dimension_semantics = [#tpu.dimension_semantics<parallel>], iteration_bounds = array<i64: 1>, scalar_prefetch = 0 : i64, scratch_operands = 0 : i64, tpu.core_type = #tpu.core_type<tc>, window_params = [{pipeline_mode = #tpu.pipeline_mode<synchronous>, transform_indices = @transform_0, window_bounds = array<i64: 4, 32>}, {transform_indices = @transform_1, window_bounds = array<i64: 4, 1024>}]} {
    %0 = tpu.iota {dimensions = array<i32: 1>} : vector<1x1024xi32>
    %c8_i32 = arith.constant 8 : i32
    %1 = arith.muli %arg0, %c8_i32 : i32
    %c7_i32 = arith.constant 7 : i32
    %2 = vector.broadcast %c7_i32 : i32 to vector<1x1024xi32>
    %3 = arith.shrsi %0, %2 : vector<1x1024xi32>
    %4 = vector.broadcast %1 : i32 to vector<1x1024xi32>
    %5 = arith.addi %4, %3 : vector<1x1024xi32>
    %c127_i32 = arith.constant 127 : i32
    %6 = vector.broadcast %c127_i32 : i32 to vector<1x1024xi32>
    %7 = arith.andi %0, %6 : vector<1x1024xi32>
    %8 = arith.subi %7, %5 : vector<1x1024xi32>
    %c0_i32 = arith.constant 0 : i32
    %9 = vector.broadcast %c0_i32 : i32 to vector<1x1024xi32>
    %10 = arith.subi %8, %9 : vector<1x1024xi32>
    %c0_i32_0 = arith.constant 0 : i32
    %11 = vector.broadcast %c0_i32_0 : i32 to vector<1x1024xi32>
    %12 = arith.cmpi sge, %10, %11 : vector<1x1024xi32>
    %13 = arith.extui %12 : vector<1x1024xi1> to vector<1x1024xi32>
    %c16_i32 = arith.constant 16 : i32
    %14 = vector.broadcast %c16_i32 : i32 to vector<1x1024xi32>
    %15 = arith.muli %13, %14 : vector<1x1024xi32>
    %16 = math.absi %10 : vector<1x1024xi32>
    %c8_i32_1 = arith.constant 8 : i32
    %17 = vector.broadcast %c8_i32_1 : i32 to vector<1x1024xi32>
    %18 = arith.cmpi slt, %16, %17 : vector<1x1024xi32>
    %c8_i32_2 = arith.constant 8 : i32
    %19 = vector.broadcast %c8_i32_2 : i32 to vector<1x1024xi32>
    %20 = arith.maxsi %16, %19 : vector<1x1024xi32>
    %21 = arith.sitofp %20 : vector<1x1024xi32> to vector<1x1024xf32>
    %cst = arith.constant 8.000000e+00 : f32
    %22 = vector.broadcast %cst : f32 to vector<1x1024xf32>
    %23 = arith.divf %21, %22 : vector<1x1024xf32>
    %24 = math.log %23 : vector<1x1024xf32>
    %cst_3 = arith.constant 2.77258873 : f32
    %25 = vector.broadcast %cst_3 : f32 to vector<1x1024xf32>
    %26 = arith.divf %24, %25 : vector<1x1024xf32>
    %cst_4 = arith.constant 8.000000e+00 : f32
    %27 = vector.broadcast %cst_4 : f32 to vector<1x1024xf32>
    %28 = arith.mulf %26, %27 : vector<1x1024xf32>
    %29 = arith.fptosi %28 : vector<1x1024xf32> to vector<1x1024xi32>
    %c8_i32_5 = arith.constant 8 : i32
    %30 = vector.broadcast %c8_i32_5 : i32 to vector<1x1024xi32>
    %31 = arith.addi %30, %29 : vector<1x1024xi32>
    %c15_i32 = arith.constant 15 : i32
    %32 = vector.broadcast %c15_i32 : i32 to vector<1x1024xi32>
    %33 = arith.minsi %31, %32 : vector<1x1024xi32>
    %34 = arith.select %18, %16, %33 : vector<1x1024xi1>, vector<1x1024xi32>
    %35 = arith.addi %15, %34 : vector<1x1024xi32>
    %36 = tpu.iota {dimensions = array<i32: 0>} : vector<32x1024xi32>
    %37 = vector.broadcast %35 : vector<1x1024xi32> to vector<32x1024xi32>
    %38 = arith.cmpi eq, %37, %36 : vector<32x1024xi32>
    %39 = arith.extui %38 : vector<32x1024xi1> to vector<32x1024xi32>
    %40 = arith.sitofp %39 : vector<32x1024xi32> to vector<32x1024xf32>
    %c0 = arith.constant 0 : index
    %c0_6 = arith.constant 0 : index
    %41 = vector.load %arg1[%c0, %c0_6] : memref<4x32xf32, #tpu.memory_space<vmem>>, vector<4x32xf32>
    %cst_7 = arith.constant dense<0.000000e+00> : vector<4x1024xf32>
    %42 = tpu.matmul %41, %40, %cst_7 {dimension_numbers = #tpu.dot_dimension_numbers<[1], [0], [0], [1], [0, 0, 1, 1], [], []>} : vector<4x32xf32>, vector<32x1024xf32>, vector<4x1024xf32> -> vector<4x1024xf32>
    %c0_8 = arith.constant 0 : index
    %c0_9 = arith.constant 0 : index
    %43 = vector.load %arg2[%c0_8, %c0_9] : memref<4x1024xf32, #tpu.memory_space<vmem>>, vector<4x1024xf32>
    tpu.vector_store %arg2[%c0_8, %c0_9], %42 {strides = array<i32>} : memref<4x1024xf32, #tpu.memory_space<vmem>>, vector<4x1024xf32>,
    return
  }
  func.func @transform_0(%arg0: i32) -> (i32, i32) {
    %c0_i32 = arith.constant 0 : i32
    %c0_i32_0 = arith.constant 0 : i32
    %c0_i32_1 = arith.constant 0 : i32
    return %c0_i32, %c0_i32_0 : i32, i32
  }
  func.func @transform_1(%arg0: i32) -> (i32, i32) {
    %c0_i32 = arith.constant 0 : i32
    %c0_i32_0 = arith.constant 0 : i32
    return %c0_i32, %arg0 : i32, i32
  }
}

</mosaic_0001>

<llo_original>
// kernel: relative_position_bias.1
$region0: #{relative_position_bias.1}
  #allocation0 [shape = 'u32[]', space=smem, size = 0x4, offset = 0x4, fixed_abs, tag = 'smem constant byte address 0x4 - core index']
  #allocation1 [shape = 'u32[144,128]{1,0:T(1,128)}', space=vmem, size = 0x12000, scoped, tag = 'internal scratch']
  %s0 = inlined_call_operand.hbm [shape: f32[4,32], index: 0, kind: input, shape index: {}]
  %s1 = inlined_call_operand.vmem [shape: f32[4,1024], index: 1, kind: output, shape index: {}]
  %s2 = sld [smem:[#allocation0]]
  $region18: #{relative_position_bias.1} parent=0
    _
  %s4 = ssub.s32 1, %s2
  %s5 = scalar_select 0, %s4, %s2
  $region1: #{relative_position_bias.1} parent=0
    #allocation2 [shape = 'u8[2048]{0}', space=vmem, size = 0x800, scoped, tag = 'input window, operand 0, single buffered']
    #allocation3 [shape = 's32[1]{0}', space=sflag, size = 0x4, scoped, tag = 'scoped memory for relative_position_bias.1']
    %6 = vsyncpa [#allocation3], 0
    // Predicated region
    $region2: #{relative_position_bias.1} parent=1 // pred_check
      _
    $region3: #{relative_position_bias.1} parent=1 // pred_check_branch
      %8 = sbr.rel (0) target = $region5
    $region4: #{relative_position_bias.1} parent=1 // pred_region
      %s10 = ssub.s32 64, 64
      %11 = vsyncadd [#allocation3], %s10
      %s13 = sshll.u32 [#allocation2], 4
      %s14 = int_to_ptr.vmem [resolvable:$true] %s13
      %16 = dma.hbm_to_vmem [thread:$0]  %s0, 64, %s14, [#allocation3]
    $region5: #{relative_position_bias.1} parent=1 // pred_fallthru
      _
    // Predicated region
    $region6: #{relative_position_bias.1} parent=1 // pred_check
      _
    $region7: #{relative_position_bias.1} parent=1 // pred_check_branch
      %18 = sbr.rel (0) target = $region9
    $region8: #{relative_position_bias.1} parent=1 // pred_region
      %19 = dma.done [#allocation3], 64
    $region9: #{relative_position_bias.1} parent=1 // pred_fallthru
      _
    %v20 = vlaneseq
    %v21 = vand.u32 %v20, 127
    %v22 = vadd.s32 %v21, 128
    %v23 = vadd.s32 %v21, 256
    %v24 = vadd.s32 %v21, 384
    %v25 = vadd.s32 %v21, 512
    %v26 = vadd.s32 %v21, 640
    %v27 = vadd.s32 %v21, 768
    %v28 = vadd.s32 %v21, 896
    %s29 = smul.u32 0, 8
    %v30 = vshra.s32 %v21, 7
    %v31 = vshra.s32 %v22, 7
    %v32 = vshra.s32 %v23, 7
    %v33 = vshra.s32 %v24, 7
    %v34 = vshra.s32 %v25, 7
    %v35 = vshra.s32 %v26, 7
    %v36 = vshra.s32 %v27, 7
    %v37 = vshra.s32 %v28, 7
    %v38 = vstv %s29
    %v39 = vadd.s32 %v38, %v30
    %v40 = vadd.s32 %v38, %v31
    %v41 = vadd.s32 %v38, %v32
    %v42 = vadd.s32 %v38, %v33
    %v43 = vadd.s32 %v38, %v34
    %v44 = vadd.s32 %v38, %v35
    %v45 = vadd.s32 %v38, %v36
    %v46 = vadd.s32 %v38, %v37
    %v47 = vand.u32 %v21, 127
    %v48 = vand.u32 %v22, 127
    %v49 = vand.u32 %v23, 127
    %v50 = vand.u32 %v24, 127
    %v51 = vand.u32 %v25, 127
    %v52 = vand.u32 %v26, 127
    %v53 = vand.u32 %v27, 127
    %v54 = vand.u32 %v28, 127
    %v55 = vsub.s32 %v47, %v39
    %v56 = vsub.s32 %v48, %v40
    %v57 = vsub.s32 %v49, %v41
    %v58 = vsub.s32 %v50, %v42
    %v59 = vsub.s32 %v51, %v43
    %v60 = vsub.s32 %v52, %v44
    %v61 = vsub.s32 %v53, %v45
    %v62 = vsub.s32 %v54, %v46
    %vm63 = vcmp.ge.s32.totalorder %v55, 0
    %vm64 = vcmp.ge.s32.totalorder %v56, 0
    %vm65 = vcmp.ge.s32.totalorder %v57, 0
    %vm66 = vcmp.ge.s32.totalorder %v58, 0
    %vm67 = vcmp.ge.s32.totalorder %v59, 0
    %vm68 = vcmp.ge.s32.totalorder %v60, 0
    %vm69 = vcmp.ge.s32.totalorder %v61, 0
    %vm70 = vcmp.ge.s32.totalorder %v62, 0
    %v71 = vsel %vm63, 1, 0
    %v72 = vsel %vm64, 1, 0
    %v73 = vsel %vm65, 1, 0
    %v74 = vsel %vm66, 1, 0
    %v75 = vsel %vm67, 1, 0
    %v76 = vsel %vm68, 1, 0
    %v77 = vsel %vm69, 1, 0
    %v78 = vsel %vm70, 1, 0
    %v79 = vmul.u32 %v71, 16
    %v80 = vmul.u32 %v72, 16
    %v81 = vmul.u32 %v73, 16
    %v82 = vmul.u32 %v74, 16
    %v83 = vmul.u32 %v75, 16
    %v84 = vmul.u32 %v76, 16
    %v85 = vmul.u32 %v77, 16
    %v86 = vmul.u32 %v78, 16
    %vm87 = vcmp.lt.s32.totalorder %v55, 0
    %v88 = vsub.s32 0, %v55
    %v89 = vsel %vm87, %v88, %v55
    %vm90 = vcmp.lt.s32.totalorder %v56, 0
    %v91 = vsub.s32 0, %v56
    %v92 = vsel %vm90, %v91, %v56
    %vm93 = vcmp.lt.s32.totalorder %v57, 0
    %v94 = vsub.s32 0, %v57
    %v95 = vsel %vm93, %v94, %v57
    %vm96 = vcmp.lt.s32.totalorder %v58, 0
    %v97 = vsub.s32 0, %v58
    %v98 = vsel %vm96, %v97, %v58
    %vm99 = vcmp.lt.s32.totalorder %v59, 0
    %v100 = vsub.s32 0, %v59
    %v101 = vsel %vm99, %v100, %v59
    %vm102 = vcmp.lt.s32.totalorder %v60, 0
    %v103 = vsub.s32 0, %v60
    %v104 = vsel %vm102, %v103, %v60
    %vm105 = vcmp.lt.s32.totalorder %v61, 0
    %v106 = vsub.s32 0, %v61
    %v107 = vsel %vm105, %v106, %v61
    %vm108 = vcmp.lt.s32.totalorder %v62, 0
    %v109 = vsub.s32 0, %v62
    %v110 = vsel %vm108, %v109, %v62
    %vm111 = vcmp.lt.s32.totalorder %v89, 8
    %vm112 = vcmp.lt.s32.totalorder %v92, 8
    %vm113 = vcmp.lt.s32.totalorder %v95, 8
    %vm114 = vcmp.lt.s32.totalorder %v98, 8
    %vm115 = vcmp.lt.s32.totalorder %v101, 8
    %vm116 = vcmp.lt.s32.totalorder %v104, 8
    %vm117 = vcmp.lt.s32.totalorder %v107, 8
    %vm118 = vcmp.lt.s32.totalorder %v110, 8
    %vm119 = vcmp.gt.s32.totalorder %v89, 8
    %v120 = vsel %vm119, %v89, 8
    %vm121 = vcmp.gt.s32.totalorder %v92, 8
    %v122 = vsel %vm121, %v92, 8
    %vm123 = vcmp.gt.s32.totalorder %v95, 8
    %v124 = vsel %vm123, %v95, 8
    %vm125 = vcmp.gt.s32.totalorder %v98, 8
    %v126 = vsel %vm125, %v98, 8
    %vm127 = vcmp.gt.s32.totalorder %v101, 8
    %v128 = vsel %vm127, %v101, 8
    %vm129 = vcmp.gt.s32.totalorder %v104, 8
    %v130 = vsel %vm129, %v104, 8
    %vm131 = vcmp.gt.s32.totalorder %v107, 8
    %v132 = vsel %vm131, %v107, 8
    %vm133 = vcmp.gt.s32.totalorder %v110, 8
    %v134 = vsel %vm133, %v110, 8
    %v135 = vcvt.s32.f32 %v120
    %v136 = vcvt.s32.f32 %v122
    %v137 = vcvt.s32.f32 %v124
    %v138 = vcvt.s32.f32 %v126
    %v139 = vcvt.s32.f32 %v128
    %v140 = vcvt.s32.f32 %v130
    %v141 = vcvt.s32.f32 %v132
    %v142 = vcvt.s32.f32 %v134
    %v143 = vrcp.pop 8.0
    %v144 = vmul.f32 %v135, %v143
    %v145 = vmul.f32 %v136, %v143
    %v146 = vmul.f32 %v137, %v143
    %v147 = vmul.f32 %v138, %v143
    %v148 = vmul.f32 %v139, %v143
    %v149 = vmul.f32 %v140, %v143
    %v150 = vmul.f32 %v141, %v143
    %v151 = vmul.f32 %v142, %v143
    %v152 = vlog2.pop %v144
    %v153 = vmul.f32 %v152, 0.6931472
    %v154 = vlog2.pop %v145
    %v155 = vmul.f32 %v154, 0.6931472
    %v156 = vlog2.pop %v146
    %v157 = vmul.f32 %v156, 0.6931472
    %v158 = vlog2.pop %v147
    %v159 = vmul.f32 %v158, 0.6931472
    %v160 = vlog2.pop %v148
    %v161 = vmul.f32 %v160, 0.6931472
    %v162 = vlog2.pop %v149
    %v163 = vmul.f32 %v162, 0.6931472
    %v164 = vlog2.pop %v150
    %v165 = vmul.f32 %v164, 0.6931472
    %v166 = vlog2.pop %v151
    %v167 = vmul.f32 %v166, 0.6931472
    %v168 = vrcp.pop 2.7725887
    %v169 = vmul.f32 %v153, %v168
    %v170 = vmul.f32 %v155, %v168
    %v171 = vmul.f32 %v157, %v168
    %v172 = vmul.f32 %v159, %v168
    %v173 = vmul.f32 %v161, %v168
    %v174 = vmul.f32 %v163, %v168
    %v175 = vmul.f32 %v165, %v168
    %v176 = vmul.f32 %v167, %v168
    %v177 = vmul.f32 %v169, 8.0
    %v178 = vmul.f32 %v170, 8.0
    %v179 = vmul.f32 %v171, 8.0
    %v180 = vmul.f32 %v172, 8.0
    %v181 = vmul.f32 %v173, 8.0
    %v182 = vmul.f32 %v174, 8.0
    %v183 = vmul.f32 %v175, 8.0
    %v184 = vmul.f32 %v176, 8.0
    %v185 = vcvt.f32.s32.to.zero.pseudo %v177
    %v186 = vcvt.f32.s32.to.zero.pseudo %v178
    %v187 = vcvt.f32.s32.to.zero.pseudo %v179
    %v188 = vcvt.f32.s32.to.zero.pseudo %v180
    %v189 = vcvt.f32.s32.to.zero.pseudo %v181
    %v190 = vcvt.f32.s32.to.zero.pseudo %v182
    %v191 = vcvt.f32.s32.to.zero.pseudo %v183
    %v192 = vcvt.f32.s32.to.zero.pseudo %v184
    %v193 = vadd.s32 %v185, 8
    %v194 = vadd.s32 %v186, 8
    %v195 = vadd.s32 %v187, 8
    %v196 = vadd.s32 %v188, 8
    %v197 = vadd.s32 %v189, 8
    %v198 = vadd.s32 %v190, 8
    %v199 = vadd.s32 %v191, 8
    %v200 = vadd.s32 %v192, 8
    %vm201 = vcmp.lt.s32.totalorder %v193, 15
    %v202 = vsel %vm201, %v193, 15
    %vm203 = vcmp.lt.s32.totalorder %v194, 15
    %v204 = vsel %vm203, %v194, 15
    %vm205 = vcmp.lt.s32.totalorder %v195, 15
    %v206 = vsel %vm205, %v195, 15
    %vm207 = vcmp.lt.s32.totalorder %v196, 15
    %v208 = vsel %vm207, %v196, 15
    %vm209 = vcmp.lt.s32.totalorder %v197, 15
    %v210 = vsel %vm209, %v197, 15
    %vm211 = vcmp.lt.s32.totalorder %v198, 15
    %v212 = vsel %vm211, %v198, 15
    %vm213 = vcmp.lt.s32.totalorder %v199, 15
    %v214 = vsel %vm213, %v199, 15
    %vm215 = vcmp.lt.s32.totalorder %v200, 15
    %v216 = vsel %vm215, %v200, 15
    %v217 = vsel %vm111, %v89, %v202
    %v218 = vsel %vm112, %v92, %v204
    %v219 = vsel %vm113, %v95, %v206
    %v220 = vsel %vm114, %v98, %v208
    %v221 = vsel %vm115, %v101, %v210
    %v222 = vsel %vm116, %v104, %v212
    %v223 = vsel %vm117, %v107, %v214
    %v224 = vsel %vm118, %v110, %v216
    %v225 = vadd.s32 %v79, %v217
    %v226 = vadd.s32 %v80, %v218
    %v227 = vadd.s32 %v81, %v219
    %v228 = vadd.s32 %v82, %v220
    %v229 = vadd.s32 %v83, %v221
    %v230 = vadd.s32 %v84, %v222
    %v231 = vadd.s32 %v85, %v223
    %v232 = vadd.s32 %v86, %v224
    %v233 = vlaneseq
    %v234 = vshrl.u32 %v233, 7
    %v235 = vadd.s32 %v234, 8
    %v236 = vadd.s32 %v234, 16
    %v237 = vadd.s32 %v234, 24
    %vm238 = vcmp.eq.s32.totalorder %v225, %v234
    %vm239 = vcmp.eq.s32.totalorder %v226, %v234
    %vm240 = vcmp.eq.s32.totalorder %v227, %v234
    %vm241 = vcmp.eq.s32.totalorder %v228, %v234
    %vm242 = vcmp.eq.s32.totalorder %v229, %v234
    %vm243 = vcmp.eq.s32.totalorder %v230, %v234
    %vm244 = vcmp.eq.s32.totalorder %v231, %v234
    %vm245 = vcmp.eq.s32.totalorder %v232, %v234
    %vm246 = vcmp.eq.s32.totalorder %v225, %v235
    %vm247 = vcmp.eq.s32.totalorder %v226, %v235
    %vm248 = vcmp.eq.s32.totalorder %v227, %v235
    %vm249 = vcmp.eq.s32.totalorder %v228, %v235
    %vm250 = vcmp.eq.s32.totalorder %v229, %v235
    %vm251 = vcmp.eq.s32.totalorder %v230, %v235
    %vm252 = vcmp.eq.s32.totalorder %v231, %v235
    %vm253 = vcmp.eq.s32.totalorder %v232, %v235
    %vm254 = vcmp.eq.s32.totalorder %v225, %v236
    %vm255 = vcmp.eq.s32.totalorder %v226, %v236
    %vm256 = vcmp.eq.s32.totalorder %v227, %v236
    %vm257 = vcmp.eq.s32.totalorder %v228, %v236
    %vm258 = vcmp.eq.s32.totalorder %v229, %v236
    %vm259 = vcmp.eq.s32.totalorder %v230, %v236
    %vm260 = vcmp.eq.s32.totalorder %v231, %v236
    %vm261 = vcmp.eq.s32.totalorder %v232, %v236
    %vm262 = vcmp.eq.s32.totalorder %v225, %v237
    %vm263 = vcmp.eq.s32.totalorder %v226, %v237
    %vm264 = vcmp.eq.s32.totalorder %v227, %v237
    %vm265 = vcmp.eq.s32.totalorder %v228, %v237
    %vm266 = vcmp.eq.s32.totalorder %v229, %v237
    %vm267 = vcmp.eq.s32.totalorder %v230, %v237
    %vm268 = vcmp.eq.s32.totalorder %v231, %v237
    %vm269 = vcmp.eq.s32.totalorder %v232, %v237
    %v270 = vsel %vm238, 1, 0
    %v271 = vsel %vm239, 1, 0
    %v272 = vsel %vm240, 1, 0
    %v273 = vsel %vm241, 1, 0
    %v274 = vsel %vm242, 1, 0
    %v275 = vsel %vm243, 1, 0
    %v276 = vsel %vm244, 1, 0
    %v277 = vsel %vm245, 1, 0
    %v278 = vsel %vm246, 1, 0
    %v279 = vsel %vm247, 1, 0
    %v280 = vsel %vm248, 1, 0
    %v281 = vsel %vm249, 1, 0
    %v282 = vsel %vm250, 1, 0
    %v283 = vsel %vm251, 1, 0
    %v284 = vsel %vm252, 1, 0
    %v285 = vsel %vm253, 1, 0
    %v286 = vsel %vm254, 1, 0
    %v287 = vsel %vm255, 1, 0
    %v288 = vsel %vm256, 1, 0
    %v289 = vsel %vm257, 1, 0
    %v290 = vsel %vm258, 1, 0
    %v291 = vsel %vm259, 1, 0
    %v292 = vsel %vm260, 1, 0
    %v293 = vsel %vm261, 1, 0
    %v294 = vsel %vm262, 1, 0
    %v295 = vsel %vm263, 1, 0
    %v296 = vsel %vm264, 1, 0
    %v297 = vsel %vm265, 1, 0
    %v298 = vsel %vm266, 1, 0
    %v299 = vsel %vm267, 1, 0
    %v300 = vsel %vm268, 1, 0
    %v301 = vsel %vm269, 1, 0
    %v302 = vcvt.s32.f32 %v270
    %v303 = vcvt.s32.f32 %v271
    %v304 = vcvt.s32.f32 %v272
    %v305 = vcvt.s32.f32 %v273
    %v306 = vcvt.s32.f32 %v274
    %v307 = vcvt.s32.f32 %v275
    %v308 = vcvt.s32.f32 %v276
    %v309 = vcvt.s32.f32 %v277
    %v310 = vcvt.s32.f32 %v278
    %v311 = vcvt.s32.f32 %v279
    %v312 = vcvt.s32.f32 %v280
    %v313 = vcvt.s32.f32 %v281
    %v314 = vcvt.s32.f32 %v282
    %v315 = vcvt.s32.f32 %v283
    %v316 = vcvt.s32.f32 %v284
    %v317 = vcvt.s32.f32 %v285
    %v318 = vcvt.s32.f32 %v286
    %v319 = vcvt.s32.f32 %v287
    %v320 = vcvt.s32.f32 %v288
    %v321 = vcvt.s32.f32 %v289
    %v322 = vcvt.s32.f32 %v290
    %v323 = vcvt.s32.f32 %v291
    %v324 = vcvt.s32.f32 %v292
    %v325 = vcvt.s32.f32 %v293
    %v326 = vcvt.s32.f32 %v294
    %v327 = vcvt.s32.f32 %v295
    %v328 = vcvt.s32.f32 %v296
    %v329 = vcvt.s32.f32 %v297
    %v330 = vcvt.s32.f32 %v298
    %v331 = vcvt.s32.f32 %v299
    %v332 = vcvt.s32.f32 %v300
    %v333 = vcvt.s32.f32 %v301
    %v334 = vld [vmem:[#allocation2] sm:$0xf]
    %vm335 = vcmask 261120
    %v337 = vsel %vm335, %v334, 0
    %339 = vmatprep.subr.mxu0 0.0
    %340 = vmatpush1.msra.mxu0 0.0
    %341 = vmatprep.subr.mxu0 0.0
    %342 = vmatpush1.msra.mxu0 0.0
    %343 = vmatprep.subr.mxu0 0.0
    %344 = vmatpush1.msra.mxu0 0.0
    %345 = vmatprep.subr.mxu0 0.0
    %346 = vmatpush1.msra.mxu0 0.0
    %347 = vmatprep.subr.mxu0 0.0
    %348 = vmatpush1.msra.mxu0 0.0
    %349 = vmatprep.subr.mxu0 0.0
    %350 = vmatpush1.msra.mxu0 0.0
    %351 = vmatprep.subr.mxu0 0.0
    %352 = vmatpush1.msra.mxu0 0.0
    %353 = vmatprep.subr.mxu0 0.0
    %354 = vmatpush1.msra.mxu0 0.0
    %355 = vmatprep.subr.mxu0 0.0
    %356 = vmatpush1.msra.mxu0 0.0
    %357 = vmatprep.subr.mxu0 0.0
    %358 = vmatpush1.msra.mxu0 0.0
    %359 = vmatprep.subr.mxu0 0.0
    %360 = vmatpush1.msra.mxu0 0.0
    %361 = vmatprep.subr.mxu0 0.0
    %362 = vmatpush1.msra.mxu0 0.0
    %363 = vmatprep.subr.mxu0 %v327
    %364 = vmatpush1.msra.mxu0 %v326
    %365 = vmatprep.subr.mxu0 %v319
    %366 = vmatpush1.msra.mxu0 %v318
    %367 = vmatprep.subr.mxu0 %v311
    %368 = vmatpush1.msra.mxu0 %v310
    %369 = vmatprep.subr.mxu0 %v303
    %370 = vmatpush1.msra.mxu0 %v302
    %371 = vmatprep.subr.mxu0 0.0
    %372 = vmatpush2.msra.mxu0 0.0
    %373 = vmatprep.subr.mxu0 0.0
    %374 = vmatpush2.msra.mxu0 0.0
    %375 = vmatprep.subr.mxu0 0.0
    %376 = vmatpush2.msra.mxu0 0.0
    %377 = vmatprep.subr.mxu0 0.0
    %378 = vmatpush2.msra.mxu0 0.0
    %379 = vmatprep.subr.mxu0 0.0
    %380 = vmatpush2.msra.mxu0 0.0
    %381 = vmatprep.subr.mxu0 0.0
    %382 = vmatpush2.msra.mxu0 0.0
    %383 = vmatprep.subr.mxu0 0.0
    %384 = vmatpush2.msra.mxu0 0.0
    %385 = vmatprep.subr.mxu0 0.0
    %386 = vmatpush2.msra.mxu0 0.0
    %387 = vmatprep.subr.mxu0 0.0
    %388 = vmatpush2.msra.mxu0 0.0
    %389 = vmatprep.subr.mxu0 0.0
    %390 = vmatpush2.msra.mxu0 0.0
    %391 = vmatprep.subr.mxu0 0.0
    %392 = vmatpush2.msra.mxu0 0.0
    %393 = vmatprep.subr.mxu0 0.0
    %394 = vmatpush2.msra.mxu0 0.0
    %395 = vmatprep.subr.mxu0 0.0
    %396 = vmatpush2.msra.mxu0 0.0
    %397 = vmatprep.subr.mxu0 0.0
    %398 = vmatpush2.msra.mxu0 0.0
    %399 = vmatprep.subr.mxu0 0.0
    %400 = vmatpush2.msra.mxu0 0.0
    %401 = vmatprep.subr.mxu0 0.0
    %402 = vmatpush2.msra.mxu0 0.0
    %403 = vmatprep.mubr.f32.mxu0 0.0
    %404 = vmatmul.mubr.f32.gmra.mxu0 %v337
    %v405 = vpop.f32.mrf.mxu0
    %v406 = vadd.f32 0.0, %v405
    %v407 = vpop.f32.mrf.mxu0
    %v408 = vadd.f32 0.0, %v407
    %409 = vdwg.mxu0
    %410 = vmatprep.subr.mxu0 0.0
    %411 = vmatpush1.msra.mxu0 0.0
    %412 = vmatprep.subr.mxu0 0.0
    %413 = vmatpush1.msra.mxu0 0.0
    %414 = vmatprep.subr.mxu0 0.0
    %415 = vmatpush1.msra.mxu0 0.0
    %416 = vmatprep.subr.mxu0 0.0
    %417 = vmatpush1.msra.mxu0 0.0
    %418 = vmatprep.subr.mxu0 0.0
    %419 = vmatpush1.msra.mxu0 0.0
    %420 = vmatprep.subr.mxu0 0.0
    %421 = vmatpush1.msra.mxu0 0.0
    %422 = vmatprep.subr.mxu0 0.0
    %423 = vmatpush1.msra.mxu0 0.0
    %424 = vmatprep.subr.mxu0 0.0
    %425 = vmatpush1.msra.mxu0 0.0
    %426 = vmatprep.subr.mxu0 0.0
    %427 = vmatpush1.msra.mxu0 0.0
    %428 = vmatprep.subr.mxu0 0.0
    %429 = vmatpush1.msra.mxu0 0.0
    %430 = vmatprep.subr.mxu0 0.0
    %431 = vmatpush1.msra.mxu0 0.0
    %432 = vmatprep.subr.mxu0 0.0
    %433 = vmatpush1.msra.mxu0 0.0
    %434 = vmatprep.subr.mxu0 %v329
    %435 = vmatpush1.msra.mxu0 %v328
    %436 = vmatprep.subr.mxu0 %v321
    %437 = vmatpush1.msra.mxu0 %v320
    %438 = vmatprep.subr.mxu0 %v313
    %439 = vmatpush1.msra.mxu0 %v312
    %440 = vmatprep.subr.mxu0 %v305
    %441 = vmatpush1.msra.mxu0 %v304
    %442 = vmatprep.subr.mxu0 0.0
    %443 = vmatpush2.msra.mxu0 0.0
    %444 = vmatprep.subr.mxu0 0.0
    %445 = vmatpush2.msra.mxu0 0.0
    %446 = vmatprep.subr.mxu0 0.0
    %447 = vmatpush2.msra.mxu0 0.0
    %448 = vmatprep.subr.mxu0 0.0
    %449 = vmatpush2.msra.mxu0 0.0
    %450 = vmatprep.subr.mxu0 0.0
    %451 = vmatpush2.msra.mxu0 0.0
    %452 = vmatprep.subr.mxu0 0.0
    %453 = vmatpush2.msra.mxu0 0.0
    %454 = vmatprep.subr.mxu0 0.0
    %455 = vmatpush2.msra.mxu0 0.0
    %456 = vmatprep.subr.mxu0 0.0
    %457 = vmatpush2.msra.mxu0 0.0
    %458 = vmatprep.subr.mxu0 0.0
    %459 = vmatpush2.msra.mxu0 0.0
    %460 = vmatprep.subr.mxu0 0.0
    %461 = vmatpush2.msra.mxu0 0.0
    %462 = vmatprep.subr.mxu0 0.0
    %463 = vmatpush2.msra.mxu0 0.0
    %464 = vmatprep.subr.mxu0 0.0
    %465 = vmatpush2.msra.mxu0 0.0
    %466 = vmatprep.subr.mxu0 0.0
    %467 = vmatpush2.msra.mxu0 0.0
    %468 = vmatprep.subr.mxu0 0.0
    %469 = vmatpush2.msra.mxu0 0.0
    %470 = vmatprep.subr.mxu0 0.0
    %471 = vmatpush2.msra.mxu0 0.0
    %472 = vmatprep.subr.mxu0 0.0
    %473 = vmatpush2.msra.mxu0 0.0
    %474 = vmatprep.mubr.f32.mxu0 0.0
    %475 = vmatmul.mubr.f32.gmra.mxu0 %v337
    %v476 = vpop.f32.mrf.mxu0
    %v477 = vadd.f32 0.0, %v476
    %v478 = vpop.f32.mrf.mxu0
    %v479 = vadd.f32 0.0, %v478
    %480 = vdwg.mxu0
    %481 = vmatprep.subr.mxu0 0.0
    %482 = vmatpush1.msra.mxu0 0.0
    %483 = vmatprep.subr.mxu0 0.0
    %484 = vmatpush1.msra.mxu0 0.0
    %485 = vmatprep.subr.mxu0 0.0
    %486 = vmatpush1.msra.mxu0 0.0
    %487 = vmatprep.subr.mxu0 0.0
    %488 = vmatpush1.msra.mxu0 0.0
    %489 = vmatprep.subr.mxu0 0.0
    %490 = vmatpush1.msra.mxu0 0.0
    %491 = vmatprep.subr.mxu0 0.0
    %492 = vmatpush1.msra.mxu0 0.0
    %493 = vmatprep.subr.mxu0 0.0
    %494 = vmatpush1.msra.mxu0 0.0
    %495 = vmatprep.subr.mxu0 0.0
    %496 = vmatpush1.msra.mxu0 0.0
    %497 = vmatprep.subr.mxu0 0.0
    %498 = vmatpush1.msra.mxu0 0.0
    %499 = vmatprep.subr.mxu0 0.0
    %500 = vmatpush1.msra.mxu0 0.0
    %501 = vmatprep.subr.mxu0 0.0
    %502 = vmatpush1.msra.mxu0 0.0
    %503 = vmatprep.subr.mxu0 0.0
    %504 = vmatpush1.msra.mxu0 0.0
    %505 = vmatprep.subr.mxu0 %v331
    %506 = vmatpush1.msra.mxu0 %v330
    %507 = vmatprep.subr.mxu0 %v323
    %508 = vmatpush1.msra.mxu0 %v322
    %509 = vmatprep.subr.mxu0 %v315
    %510 = vmatpush1.msra.mxu0 %v314
    %511 = vmatprep.subr.mxu0 %v307
    %512 = vmatpush1.msra.mxu0 %v306
    %513 = vmatprep.subr.mxu0 0.0
    %514 = vmatpush2.msra.mxu0 0.0
    %515 = vmatprep.subr.mxu0 0.0
    %516 = vmatpush2.msra.mxu0 0.0
    %517 = vmatprep.subr.mxu0 0.0
    %518 = vmatpush2.msra.mxu0 0.0
    %519 = vmatprep.subr.mxu0 0.0
    %520 = vmatpush2.msra.mxu0 0.0
    %521 = vmatprep.subr.mxu0 0.0
    %522 = vmatpush2.msra.mxu0 0.0
    %523 = vmatprep.subr.mxu0 0.0
    %524 = vmatpush2.msra.mxu0 0.0
    %525 = vmatprep.subr.mxu0 0.0
    %526 = vmatpush2.msra.mxu0 0.0
    %527 = vmatprep.subr.mxu0 0.0
    %528 = vmatpush2.msra.mxu0 0.0
    %529 = vmatprep.subr.mxu0 0.0
    %530 = vmatpush2.msra.mxu0 0.0
    %531 = vmatprep.subr.mxu0 0.0
    %532 = vmatpush2.msra.mxu0 0.0
    %533 = vmatprep.subr.mxu0 0.0
    %534 = vmatpush2.msra.mxu0 0.0
    %535 = vmatprep.subr.mxu0 0.0
    %536 = vmatpush2.msra.mxu0 0.0
    %537 = vmatprep.subr.mxu0 0.0
    %538 = vmatpush2.msra.mxu0 0.0
    %539 = vmatprep.subr.mxu0 0.0
    %540 = vmatpush2.msra.mxu0 0.0
    %541 = vmatprep.subr.mxu0 0.0
    %542 = vmatpush2.msra.mxu0 0.0
    %543 = vmatprep.subr.mxu0 0.0
    %544 = vmatpush2.msra.mxu0 0.0
    %545 = vmatprep.mubr.f32.mxu0 0.0
    %546 = vmatmul.mubr.f32.gmra.mxu0 %v337
    %v547 = vpop.f32.mrf.mxu0
    %v548 = vadd.f32 0.0, %v547
    %v549 = vpop.f32.mrf.mxu0
    %v550 = vadd.f32 0.0, %v549
    %551 = vdwg.mxu0
    %552 = vmatprep.subr.mxu0 0.0
    %553 = vmatpush1.msra.mxu0 0.0
    %554 = vmatprep.subr.mxu0 0.0
    %555 = vmatpush1.msra.mxu0 0.0
    %556 = vmatprep.subr.mxu0 0.0
    %557 = vmatpush1.msra.mxu0 0.0
    %558 = vmatprep.subr.mxu0 0.0
    %559 = vmatpush1.msra.mxu0 0.0
    %560 = vmatprep.subr.mxu0 0.0
    %561 = vmatpush1.msra.mxu0 0.0
    %562 = vmatprep.subr.mxu0 0.0
    %563 = vmatpush1.msra.mxu0 0.0
    %564 = vmatprep.subr.mxu0 0.0
    %565 = vmatpush1.msra.mxu0 0.0
    %566 = vmatprep.subr.mxu0 0.0
    %567 = vmatpush1.msra.mxu0 0.0
    %568 = vmatprep.subr.mxu0 0.0
    %569 = vmatpush1.msra.mxu0 0.0
    %570 = vmatprep.subr.mxu0 0.0
    %571 = vmatpush1.msra.mxu0 0.0
    %572 = vmatprep.subr.mxu0 0.0
    %573 = vmatpush1.msra.mxu0 0.0
    %574 = vmatprep.subr.mxu0 0.0
    %575 = vmatpush1.msra.mxu0 0.0
    %576 = vmatprep.subr.mxu0 %v333
    %577 = vmatpush1.msra.mxu0 %v332
    %578 = vmatprep.subr.mxu0 %v325
    %579 = vmatpush1.msra.mxu0 %v324
    %580 = vmatprep.subr.mxu0 %v317
    %581 = vmatpush1.msra.mxu0 %v316
    %582 = vmatprep.subr.mxu0 %v309
    %583 = vmatpush1.msra.mxu0 %v308
    %584 = vmatprep.subr.mxu0 0.0
    %585 = vmatpush2.msra.mxu0 0.0
    %586 = vmatprep.subr.mxu0 0.0
    %587 = vmatpush2.msra.mxu0 0.0
    %588 = vmatprep.subr.mxu0 0.0
    %589 = vmatpush2.msra.mxu0 0.0
    %590 = vmatprep.subr.mxu0 0.0
    %591 = vmatpush2.msra.mxu0 0.0
    %592 = vmatprep.subr.mxu0 0.0
    %593 = vmatpush2.msra.mxu0 0.0
    %594 = vmatprep.subr.mxu0 0.0
    %595 = vmatpush2.msra.mxu0 0.0
    %596 = vmatprep.subr.mxu0 0.0
    %597 = vmatpush2.msra.mxu0 0.0
    %598 = vmatprep.subr.mxu0 0.0
    %599 = vmatpush2.msra.mxu0 0.0
    %600 = vmatprep.subr.mxu0 0.0
    %601 = vmatpush2.msra.mxu0 0.0
    %602 = vmatprep.subr.mxu0 0.0
    %603 = vmatpush2.msra.mxu0 0.0
    %604 = vmatprep.subr.mxu0 0.0
    %605 = vmatpush2.msra.mxu0 0.0
    %606 = vmatprep.subr.mxu0 0.0
    %607 = vmatpush2.msra.mxu0 0.0
    %608 = vmatprep.subr.mxu0 0.0
    %609 = vmatpush2.msra.mxu0 0.0
    %610 = vmatprep.subr.mxu0 0.0
    %611 = vmatpush2.msra.mxu0 0.0
    %612 = vmatprep.subr.mxu0 0.0
    %613 = vmatpush2.msra.mxu0 0.0
    %614 = vmatprep.subr.mxu0 0.0
    %615 = vmatpush2.msra.mxu0 0.0
    %616 = vmatprep.mubr.f32.mxu0 0.0
    %617 = vmatmul.mubr.f32.gmra.mxu0 %v337
    %v618 = vpop.f32.mrf.mxu0
    %v619 = vadd.f32 0.0, %v618
    %v620 = vpop.f32.mrf.mxu0
    %v621 = vadd.f32 0.0, %v620
    %622 = vdwg.mxu0
    %v631 = vcombine.low %v406, %v408
    %v632 = vcombine.low %v477, %v479
    %v633 = vcombine.low %v548, %v550
    %v634 = vcombine.low %v619, %v621
    %639 = vst [vmem:[%s1] sm:$0xff] %v631
    %640 = vst [vmem:[%s1 + $0x8] sm:$0xff] %v632
    %641 = vst [vmem:[%s1 + $0x10] sm:$0xff] %v633
    %642 = vst [vmem:[%s1 + $0x18] sm:$0xff] %v634
    // Predicated region
    $region10: #{relative_position_bias.1} parent=1 // pred_check
      _
    $region11: #{relative_position_bias.1} parent=1 // pred_check_branch
      %644 = sbr.rel (0) target = $region13
    $region12: #{relative_position_bias.1} parent=1 // pred_region
      _
    $region13: #{relative_position_bias.1} parent=1 // pred_fallthru
      _
    // Predicated region
    $region14: #{relative_position_bias.1} parent=1 // pred_check
      _
    $region15: #{relative_position_bias.1} parent=1 // pred_check_branch
      %646 = sbr.rel (0) target = $region17
    $region16: #{relative_position_bias.1} parent=1 // pred_region
      _
    $region17: #{relative_position_bias.1} parent=1 // pred_fallthru
      _
    %647 = vsyncpa [#allocation3], 1

</llo_original>
